<compile_context>
chip_gen: v6e
topology: v6e:2x2x1
jax: 0.10.0
libtpu: 0.0.40
codegen_flags: <defaults>
</compile_context>

<pallas_src>
import functools

import jax
import jax.numpy as jnp
from jax.experimental import pallas as pl
from jax.experimental.pallas import tpu as pltpu


def _round_up(x, m):
    return (x + m - 1) // m * m


def _mlp_kernel(*refs, num_layers, apply_sigmoid):
    """refs = (x_ref, w0, b0, w1, b1, ..., w_{L-1}, b_{L-1}, out_ref)."""
    x_ref = refs[0]
    out_ref = refs[-1]

    h = x_ref[...]  # [tile_m, F_pad], f32
    for i in range(num_layers):
        w = refs[1 + 2 * i][...]        # [K_pad, N_pad], f32 (resident in VMEM)
        b = refs[2 + 2 * i][...]        # [1, N_pad]
        h = jnp.dot(h, w, preferred_element_type=jnp.float32) + b
        if i < num_layers - 1:
            # LeakyReLU(0.2): pure VPU select.
            h = jnp.where(h > 0.0, h, 0.2 * h)
            # TODO(synk): Dropout(0.5) is identity here (eval-mode forward).
    if apply_sigmoid:
        # sigmoid(x) = 1 / (1 + exp(-x)); reciprocal goes to the EUP slot.
        h = pl.reciprocal(1.0 + jnp.exp(-h), approx=True)
    out_ref[...] = h.astype(out_ref.dtype)


def init_classifier_params(key, input_dim, dis_dims, st_ed):
    """PyTorch-layout parameters: list of (W[out, in], b[out])."""
    st, ed = st_ed
    gap = ed - st
    dim = input_dim - gap
    fan_ins = [dim] + list(dis_dims)
    out_dim = 1 if gap in (1, 2) else gap
    fan_outs = list(dis_dims) + [out_dim]
    params = []
    for fan_in, fan_out in zip(fan_ins, fan_outs):
        key, kw, kb = jax.random.split(key, 3)
        bound = 1.0 / float(fan_in) ** 0.5
        W = jax.random.uniform(kw, (fan_out, fan_in), jnp.float32, -bound, bound)
        b = jax.random.uniform(kb, (fan_out,), jnp.float32, -bound, bound)
        params.append((W, b))
    return params


def classifier_forward(x, params, st_ed, *, tile_m=512, interpret=False):
    """Forward pass matching the PyTorch `Classifier.forward` semantics."""
    st, ed = st_ed
    gap = ed - st
    B, F = x.shape
    num_layers = len(params)

    # ---------------- label path (cheap, plain XLA, outside the kernel) --------
    if gap == 1:
        label = x[:, st:ed]                                   # [B, 1] float
    else:
        label = jnp.argmax(x[:, st:ed], axis=-1).astype(jnp.int32)  # [B] int32

    # ---------------- build lane/sublane aligned operands ----------------------
    F_pad = _round_up(F, 128)

    # First layer: fold the column-drop concat into zeroed weight rows.
    W0, b0 = params[0]                     # PyTorch layout [out, in_eff]
    H0 = W0.shape[0]
    W0t = W0.T                             # [in_eff, out]
    W0_full = jnp.zeros((F, H0), dtype=W0.dtype)
    W0_full = W0_full.at[:st, :].set(W0t[:st, :])
    W0_full = W0_full.at[ed:, :].set(W0t[st:, :])

    Wt_list = [W0_full] + [W.T for (W, _) in params[1:]]      # [in, out] layout
    b_list = [b for (_, b) in params]

    def _pad2d(a, rows, cols):
        return jnp.zeros((rows, cols), a.dtype).at[: a.shape[0], : a.shape[1]].set(a)

    padded_ws, padded_bs = [], []
    for Wt, b in zip(Wt_list, b_list):
        k, n = Wt.shape
        k_pad, n_pad = _round_up(k, 128), _round_up(n, 128)
        padded_ws.append(_pad2d(Wt, k_pad, n_pad))
        padded_bs.append(_pad2d(b.reshape(1, -1), 1, n_pad))

    out_n = params[-1][0].shape[0]
    out_pad = padded_ws[-1].shape[1]

    # Batch tiling: biggest tile that makes sense for this batch, sublane aligned.
    tm = min(tile_m, _round_up(B, 8))
    tm = _round_up(tm, 8)
    B_pad = _round_up(B, tm)
    x_padded = jnp.zeros((B_pad, F_pad), x.dtype).at[:B, :F].set(x)

    # ---------------- fused pallas_call ----------------------------------------
    in_specs = [pl.BlockSpec((tm, F_pad), lambda i: (i, 0))]
    operands = [x_padded]
    for W_p, b_p in zip(padded_ws, padded_bs):
        in_specs.append(pl.BlockSpec(W_p.shape, lambda i: (0, 0)))  # weight resident
        in_specs.append(pl.BlockSpec(b_p.shape, lambda i: (0, 0)))  # bias resident
        operands.append(W_p)
        operands.append(b_p)

    kernel = functools.partial(
        _mlp_kernel, num_layers=num_layers, apply_sigmoid=(gap == 2)
    )

    out_padded = pl.pallas_call(
        kernel,
        out_shape=jax.ShapeDtypeStruct((B_pad, out_pad), x.dtype),
        grid=(B_pad // tm,),
        in_specs=in_specs,
        out_specs=pl.BlockSpec((tm, out_pad), lambda i: (i, 0)),
        compiler_params=pltpu.CompilerParams(
            dimension_semantics=("parallel",),
            vmem_limit_bytes=48 * 1024 * 1024,  # safe on v5e/v6e (128 MiB) and v7x (64 MiB)
        ),
        interpret=interpret,
    )(*operands)

    out = out_padded[:B, :out_n]
    if gap in (1, 2):
        return out.reshape(-1), label
    return out, label


# ---------------- pure-JAX reference (for sanity checking) ---------------------
def reference_forward(x, params, st_ed):
    st, ed = st_ed
    gap = ed - st
    if gap == 1:
        label = x[:, st:ed]
    else:
        label = jnp.argmax(x[:, st:ed], axis=-1).astype(jnp.int32)
    h = jnp.concatenate([x[:, :st], x[:, ed:]], axis=1)
    n = len(params)
    for i, (W, b) in enumerate(params):
        h = h @ W.T + b
        if i < n - 1:
            h = jnp.where(h > 0.0, h, 0.2 * h)
    if gap == 2:
        h = jax.nn.sigmoid(h)
    if gap in (1, 2):
        return h.reshape(-1), label
    return h, label


if __name__ == "__main__":
    key = jax.random.PRNGKey(0)
    B, input_dim = 16, 24
    dis_dims = (32, 32)

    kx, kp1, kp2 = jax.random.split(key, 3)
    x = jax.random.normal(kx, (B, input_dim), jnp.float32)

    # Case 1: gap == 2  (Linear(dim, 1) + Sigmoid, output .view(-1), argmax label)
    st_ed = (10, 12)
    params = init_classifier_params(kp1, input_dim, dis_dims, st_ed)
    out, label = classifier_forward(x, params, st_ed)
    out = jax.block_until_ready(out)
    label = jax.block_until_ready(label)
    ref_out, ref_label = reference_forward(x, params, st_ed)
    assert out.shape == ref_out.shape and label.shape == ref_label.shape
    assert jnp.allclose(out, ref_out, rtol=2e-2, atol=2e-2)
    assert jnp.array_equal(label, ref_label)

    # Case 2: gap == 4  (Linear(dim, gap), no sigmoid, argmax label)
    st_ed2 = (4, 8)
    params2 = init_classifier_params(kp2, input_dim, dis_dims, st_ed2)
    out2, label2 = classifier_forward(x, params2, st_ed2)
    out2 = jax.block_until_ready(out2)
    label2 = jax.block_until_ready(label2)
    ref_out2, ref_label2 = reference_forward(x, params2, st_ed2)
    assert out2.shape == ref_out2.shape and label2.shape == ref_label2.shape
    assert jnp.allclose(out2, ref_out2, rtol=2e-2, atol=2e-2)
    assert jnp.array_equal(label2, ref_label2)

    print("KERNEL_OK")
</pallas_src>

<mosaic_0001>
module attributes {stable_mosaic.version = 11 : i64} {
  func.func @_mlp_kernel(%arg0: i32, %arg1: memref<16x128xf32, #tpu.memory_space<vmem>>, %arg2: memref<128x128xf32, #tpu.memory_space<vmem>>, %arg3: memref<1x128xf32, #tpu.memory_space<vmem>>, %arg4: memref<128x128xf32, #tpu.memory_space<vmem>>, %arg5: memref<1x128xf32, #tpu.memory_space<vmem>>, %arg6: memref<128x128xf32, #tpu.memory_space<vmem>>, %arg7: memref<1x128xf32, #tpu.memory_space<vmem>>, %arg8: memref<16x128xf32, #tpu.memory_space<vmem>>) attributes {dimension_semantics = [#tpu.dimension_semantics<parallel>], iteration_bounds = array<i64: 1>, scalar_prefetch = 0 : i64, scratch_operands = 0 : i64, tpu.core_type = #tpu.core_type<tc>, window_params = [{transform_indices = @transform_0, window_bounds = array<i64: 16, 128>}, {pipeline_mode = #tpu.pipeline_mode<synchronous>, transform_indices = @transform_1, window_bounds = array<i64: 128, 128>}, {pipeline_mode = #tpu.pipeline_mode<synchronous>, transform_indices = @transform_2, window_bounds = array<i64: 1, 128>}, {pipeline_mode = #tpu.pipeline_mode<synchronous>, transform_indices = @transform_3, window_bounds = array<i64: 128, 128>}, {pipeline_mode = #tpu.pipeline_mode<synchronous>, transform_indices = @transform_4, window_bounds = array<i64: 1, 128>}, {pipeline_mode = #tpu.pipeline_mode<synchronous>, transform_indices = @transform_5, window_bounds = array<i64: 128, 128>}, {pipeline_mode = #tpu.pipeline_mode<synchronous>, transform_indices = @transform_6, window_bounds = array<i64: 1, 128>}, {transform_indices = @transform_7, window_bounds = array<i64: 16, 128>}]} {
    %c0 = arith.constant 0 : index
    %c0_0 = arith.constant 0 : index
    %0 = vector.load %arg1[%c0, %c0_0] : memref<16x128xf32, #tpu.memory_space<vmem>>, vector<16x128xf32>
    %c0_1 = arith.constant 0 : index
    %c0_2 = arith.constant 0 : index
    %1 = vector.load %arg2[%c0_1, %c0_2] : memref<128x128xf32, #tpu.memory_space<vmem>>, vector<128x128xf32>
    %c0_3 = arith.constant 0 : index
    %c0_4 = arith.constant 0 : index
    %2 = vector.load %arg3[%c0_3, %c0_4] : memref<1x128xf32, #tpu.memory_space<vmem>>, vector<1x128xf32>
    %cst = arith.constant dense<0.000000e+00> : vector<16x128xf32>
    %3 = tpu.matmul %0, %1, %cst {dimension_numbers = #tpu.dot_dimension_numbers<[1], [0], [0], [1], [0, 0, 1, 1], [], []>} : vector<16x128xf32>, vector<128x128xf32>, vector<16x128xf32> -> vector<16x128xf32>
    %4 = vector.broadcast %2 : vector<1x128xf32> to vector<16x128xf32>
    %5 = arith.addf %3, %4 : vector<16x128xf32>
    %cst_5 = arith.constant 0.000000e+00 : f32
    %6 = vector.broadcast %cst_5 : f32 to vector<16x128xf32>
    %7 = arith.cmpf ogt, %5, %6 : vector<16x128xf32>
    %cst_6 = arith.constant 2.000000e-01 : f32
    %8 = vector.broadcast %cst_6 : f32 to vector<16x128xf32>
    %9 = arith.mulf %8, %5 : vector<16x128xf32>
    %10 = arith.select %7, %5, %9 : vector<16x128xi1>, vector<16x128xf32>
    %c0_7 = arith.constant 0 : index
    %c0_8 = arith.constant 0 : index
    %11 = vector.load %arg4[%c0_7, %c0_8] : memref<128x128xf32, #tpu.memory_space<vmem>>, vector<128x128xf32>
    %c0_9 = arith.constant 0 : index
    %c0_10 = arith.constant 0 : index
    %12 = vector.load %arg5[%c0_9, %c0_10] : memref<1x128xf32, #tpu.memory_space<vmem>>, vector<1x128xf32>
    %cst_11 = arith.constant dense<0.000000e+00> : vector<16x128xf32>
    %13 = tpu.matmul %10, %11, %cst_11 {dimension_numbers = #tpu.dot_dimension_numbers<[1], [0], [0], [1], [0, 0, 1, 1], [], []>} : vector<16x128xf32>, vector<128x128xf32>, vector<16x128xf32> -> vector<16x128xf32>
    %14 = vector.broadcast %12 : vector<1x128xf32> to vector<16x128xf32>
    %15 = arith.addf %13, %14 : vector<16x128xf32>
    %cst_12 = arith.constant 0.000000e+00 : f32
    %16 = vector.broadcast %cst_12 : f32 to vector<16x128xf32>
    %17 = arith.cmpf ogt, %15, %16 : vector<16x128xf32>
    %cst_13 = arith.constant 2.000000e-01 : f32
    %18 = vector.broadcast %cst_13 : f32 to vector<16x128xf32>
    %19 = arith.mulf %18, %15 : vector<16x128xf32>
    %20 = arith.select %17, %15, %19 : vector<16x128xi1>, vector<16x128xf32>
    %c0_14 = arith.constant 0 : index
    %c0_15 = arith.constant 0 : index
    %21 = vector.load %arg6[%c0_14, %c0_15] : memref<128x128xf32, #tpu.memory_space<vmem>>, vector<128x128xf32>
    %c0_16 = arith.constant 0 : index
    %c0_17 = arith.constant 0 : index
    %22 = vector.load %arg7[%c0_16, %c0_17] : memref<1x128xf32, #tpu.memory_space<vmem>>, vector<1x128xf32>
    %cst_18 = arith.constant dense<0.000000e+00> : vector<16x128xf32>
    %23 = tpu.matmul %20, %21, %cst_18 {dimension_numbers = #tpu.dot_dimension_numbers<[1], [0], [0], [1], [0, 0, 1, 1], [], []>} : vector<16x128xf32>, vector<128x128xf32>, vector<16x128xf32> -> vector<16x128xf32>
    %24 = vector.broadcast %22 : vector<1x128xf32> to vector<16x128xf32>
    %25 = arith.addf %23, %24 : vector<16x128xf32>
    %cst_19 = arith.constant 0.000000e+00 : f32
    %26 = vector.broadcast %cst_19 : f32 to vector<16x128xf32>
    %27 = arith.subf %26, %25 : vector<16x128xf32>
    %28 = math.exp %27 : vector<16x128xf32>
    %cst_20 = arith.constant 1.000000e+00 : f32
    %29 = vector.broadcast %cst_20 : f32 to vector<16x128xf32>
    %30 = arith.addf %29, %28 : vector<16x128xf32>
    %31 = tpu.reciprocal %30 {approx = true} : vector<16x128xf32> -> vector<16x128xf32>
    %c0_21 = arith.constant 0 : index
    %c0_22 = arith.constant 0 : index
    %32 = vector.load %arg8[%c0_21, %c0_22] : memref<16x128xf32, #tpu.memory_space<vmem>>, vector<16x128xf32>
    tpu.vector_store %arg8[%c0_21, %c0_22], %31 {strides = array<i32>} : memref<16x128xf32, #tpu.memory_space<vmem>>, vector<16x128xf32>,
    return
  }
  func.func @transform_0(%arg0: i32) -> (i32, i32) {
    %c0_i32 = arith.constant 0 : i32
    %c0_i32_0 = arith.constant 0 : i32
    return %arg0, %c0_i32 : i32, i32
  }
  func.func @transform_1(%arg0: i32) -> (i32, i32) {
    %c0_i32 = arith.constant 0 : i32
    %c0_i32_0 = arith.constant 0 : i32
    %c0_i32_1 = arith.constant 0 : i32
    return %c0_i32, %c0_i32_0 : i32, i32
  }
  func.func @transform_2(%arg0: i32) -> (i32, i32) {
    %c0_i32 = arith.constant 0 : i32
    %c0_i32_0 = arith.constant 0 : i32
    %c0_i32_1 = arith.constant 0 : i32
    return %c0_i32, %c0_i32_0 : i32, i32
  }
  func.func @transform_3(%arg0: i32) -> (i32, i32) {
    %c0_i32 = arith.constant 0 : i32
    %c0_i32_0 = arith.constant 0 : i32
    %c0_i32_1 = arith.constant 0 : i32
    return %c0_i32, %c0_i32_0 : i32, i32
  }
  func.func @transform_4(%arg0: i32) -> (i32, i32) {
    %c0_i32 = arith.constant 0 : i32
    %c0_i32_0 = arith.constant 0 : i32
    %c0_i32_1 = arith.constant 0 : i32
    return %c0_i32, %c0_i32_0 : i32, i32
  }
  func.func @transform_5(%arg0: i32) -> (i32, i32) {
    %c0_i32 = arith.constant 0 : i32
    %c0_i32_0 = arith.constant 0 : i32
    %c0_i32_1 = arith.constant 0 : i32
    return %c0_i32, %c0_i32_0 : i32, i32
  }
  func.func @transform_6(%arg0: i32) -> (i32, i32) {
    %c0_i32 = arith.constant 0 : i32
    %c0_i32_0 = arith.constant 0 : i32
    %c0_i32_1 = arith.constant 0 : i32
    return %c0_i32, %c0_i32_0 : i32, i32
  }
  func.func @transform_7(%arg0: i32) -> (i32, i32) {
    %c0_i32 = arith.constant 0 : i32
    %c0_i32_0 = arith.constant 0 : i32
    return %arg0, %c0_i32 : i32, i32
  }
}

</mosaic_0001>

<llo_original>
// kernel: tpu_custom_call.1
$region0: #{tpu_custom_call.1}
  #allocation0 [shape = 'u32[]', space=smem, size = 0x4, offset = 0x4, fixed_abs, tag = 'smem constant byte address 0x4 - core index']
  #allocation1 [shape = 'u32[144,128]{1,0:T(1,128)}', space=vmem, size = 0x12000, scoped, tag = 'internal scratch']
  %s0 = inlined_call_operand.hbm [shape: f32[16,128], index: 0, kind: input, shape index: {}]
  %s1 = inlined_call_operand.hbm [shape: f32[128,128], index: 1, kind: input, shape index: {}]
  %s2 = inlined_call_operand.vmem [shape: f32[1,128], index: 2, kind: input, shape index: {}]
  %s3 = inlined_call_operand.hbm [shape: f32[128,128], index: 3, kind: input, shape index: {}]
  %s4 = inlined_call_operand.vmem [shape: f32[1,128], index: 4, kind: input, shape index: {}]
  %s5 = inlined_call_operand.hbm [shape: f32[128,128], index: 5, kind: input, shape index: {}]
  %s6 = inlined_call_operand.vmem [shape: f32[1,128], index: 6, kind: input, shape index: {}]
  %s7 = inlined_call_operand.hbm [shape: f32[16,128], index: 7, kind: output, shape index: {}]
  %s8 = sld [smem:[#allocation0]]
  $region54: #{tpu_custom_call.1} parent=0
    _
  %s10 = ssub.s32 1, %s8
  %s11 = scalar_select 0, %s10, %s8
  $region1: #{tpu_custom_call.1} parent=0
    #allocation2 [shape = 'u8[8192]{0}', space=vmem, size = 0x2000, scoped, tag = 'input window, operand 0, single buffered']
    #allocation3 [shape = 's32[1]{0}', space=sflag, size = 0x4, scoped, tag = 'scoped memory for tpu_custom_call.1']
    #allocation4 [shape = 's32[1]{0}', space=sflag, size = 0x4, scoped, tag = 'scoped memory for tpu_custom_call.1']
    #allocation5 [shape = 'u8[65536]{0}', space=vmem, size = 0x10000, scoped, tag = 'input window, operand 1, single buffered']
    #allocation6 [shape = 's32[1]{0}', space=sflag, size = 0x4, scoped, tag = 'scoped memory for tpu_custom_call.1']
    #allocation7 [shape = 'u8[65536]{0}', space=vmem, size = 0x10000, scoped, tag = 'input window, operand 3, single buffered']
    #allocation8 [shape = 'u8[65536]{0}', space=vmem, size = 0x10000, scoped, tag = 'input window, operand 5, single buffered']
    #allocation9 [shape = 's32[1]{0}', space=sflag, size = 0x4, scoped, tag = 'scoped memory for tpu_custom_call.1']
    #allocation10 [shape = 'u8[8192]{0}', space=vmem, size = 0x2000, scoped, tag = 'output window, operand 0, single buffered']
    %12 = vsyncpa [#allocation3], 0
    %13 = vsyncpa [#allocation6], 0
    %14 = vsyncpa [#allocation9], 0
    %15 = vsyncpa [#allocation4], 0
    // Predicated region
    $region2: #{tpu_custom_call.1} parent=1 // pred_check
      _
    $region3: #{tpu_custom_call.1} parent=1 // pred_check_branch
      %17 = sbr.rel (0) target = $region5
    $region4: #{tpu_custom_call.1} parent=1 // pred_region
      %s19 = ssub.s32 256, 256
      %20 = vsyncadd [#allocation3], %s19
      %s21 = sshll.u32 [#allocation2], 4
      %s22 = int_to_ptr.vmem [resolvable:$true] %s21
      %27 = dma.hbm_to_vmem [thread:$0]  %s0, 256, %s22, [#allocation3], 128, 128, 8
    $region5: #{tpu_custom_call.1} parent=1 // pred_fallthru
      _
    // Predicated region
    $region6: #{tpu_custom_call.1} parent=1 // pred_check
      _
    $region7: #{tpu_custom_call.1} parent=1 // pred_check_branch
      %29 = sbr.rel (0) target = $region9
    $region8: #{tpu_custom_call.1} parent=1 // pred_region
      %s31 = ssub.s32 2048, 2048
      %32 = vsyncadd [#allocation6], %s31
      %s33 = sshll.u32 [#allocation5], 4
      %s34 = int_to_ptr.vmem [resolvable:$true] %s33
      %39 = dma.hbm_to_vmem [thread:$0]  %s1, 2048, %s34, [#allocation6], 128, 128, 8
    $region9: #{tpu_custom_call.1} parent=1 // pred_fallthru
      _
    // Predicated region
    $region10: #{tpu_custom_call.1} parent=1 // pred_check
      _
    $region11: #{tpu_custom_call.1} parent=1 // pred_check_branch
      %41 = sbr.rel (0) target = $region13
    $region12: #{tpu_custom_call.1} parent=1 // pred_region
      _
    $region13: #{tpu_custom_call.1} parent=1 // pred_fallthru
      _
    // Predicated region
    $region14: #{tpu_custom_call.1} parent=1 // pred_check
      _
    $region15: #{tpu_custom_call.1} parent=1 // pred_check_branch
      %43 = sbr.rel (0) target = $region17
    $region16: #{tpu_custom_call.1} parent=1 // pred_region
      %s45 = ssub.s32 2048, 2048
      %46 = vsyncadd [#allocation6], %s45
      %s47 = sshll.u32 [#allocation7], 4
      %s48 = int_to_ptr.vmem [resolvable:$true] %s47
      %53 = dma.hbm_to_vmem [thread:$0]  %s3, 2048, %s48, [#allocation6], 128, 128, 8
    $region17: #{tpu_custom_call.1} parent=1 // pred_fallthru
      _
    // Predicated region
    $region18: #{tpu_custom_call.1} parent=1 // pred_check
      _
    $region19: #{tpu_custom_call.1} parent=1 // pred_check_branch
      %55 = sbr.rel (0) target = $region21
    $region20: #{tpu_custom_call.1} parent=1 // pred_region
      _
    $region21: #{tpu_custom_call.1} parent=1 // pred_fallthru
      _
    // Predicated region
    $region22: #{tpu_custom_call.1} parent=1 // pred_check
      _
    $region23: #{tpu_custom_call.1} parent=1 // pred_check_branch
      %57 = sbr.rel (0) target = $region25
    $region24: #{tpu_custom_call.1} parent=1 // pred_region
      %s59 = ssub.s32 2048, 2048
      %60 = vsyncadd [#allocation9], %s59
      %s61 = sshll.u32 [#allocation8], 4
      %s62 = int_to_ptr.vmem [resolvable:$true] %s61
      %67 = dma.hbm_to_vmem [thread:$0]  %s5, 2048, %s62, [#allocation9], 128, 128, 8
    $region25: #{tpu_custom_call.1} parent=1 // pred_fallthru
      _
    // Predicated region
    $region26: #{tpu_custom_call.1} parent=1 // pred_check
      _
    $region27: #{tpu_custom_call.1} parent=1 // pred_check_branch
      %69 = sbr.rel (0) target = $region29
    $region28: #{tpu_custom_call.1} parent=1 // pred_region
      _
    $region29: #{tpu_custom_call.1} parent=1 // pred_fallthru
      _
    // Predicated region
    $region30: #{tpu_custom_call.1} parent=1 // pred_check
      _
    $region31: #{tpu_custom_call.1} parent=1 // pred_check_branch
      %71 = sbr.rel (0) target = $region33
    $region32: #{tpu_custom_call.1} parent=1 // pred_region
      %72 = dma.done [#allocation3], 256
    $region33: #{tpu_custom_call.1} parent=1 // pred_fallthru
      _
    // Predicated region
    $region34: #{tpu_custom_call.1} parent=1 // pred_check
      _
    $region35: #{tpu_custom_call.1} parent=1 // pred_check_branch
      %74 = sbr.rel (0) target = $region37
    $region36: #{tpu_custom_call.1} parent=1 // pred_region
      %75 = dma.done [#allocation6], 2048
    $region37: #{tpu_custom_call.1} parent=1 // pred_fallthru
      _
    // Predicated region
    $region38: #{tpu_custom_call.1} parent=1 // pred_check
      _
    $region39: #{tpu_custom_call.1} parent=1 // pred_check_branch
      %77 = sbr.rel (0) target = $region41
    $region40: #{tpu_custom_call.1} parent=1 // pred_region
      %78 = dma.done [#allocation6], 2048
    $region41: #{tpu_custom_call.1} parent=1 // pred_fallthru
      _
    // Predicated region
    $region42: #{tpu_custom_call.1} parent=1 // pred_check
      _
    $region43: #{tpu_custom_call.1} parent=1 // pred_check_branch
      %80 = sbr.rel (0) target = $region45
    $region44: #{tpu_custom_call.1} parent=1 // pred_region
      %81 = dma.done [#allocation9], 2048
    $region45: #{tpu_custom_call.1} parent=1 // pred_fallthru
      _
    %v82 = vld [vmem:[#allocation2] sm:$0xff]
    %v83 = vld [vmem:[#allocation2 + $0x8] sm:$0xff]
    %v84 = vld [vmem:[#allocation5] sm:$0xff]
    %v85 = vld [vmem:[#allocation5 + $0x8] sm:$0xff]
    %v86 = vld [vmem:[#allocation5 + $0x10] sm:$0xff]
    %v87 = vld [vmem:[#allocation5 + $0x18] sm:$0xff]
    %v88 = vld [vmem:[#allocation5 + $0x20] sm:$0xff]
    %v89 = vld [vmem:[#allocation5 + $0x28] sm:$0xff]
    %v90 = vld [vmem:[#allocation5 + $0x30] sm:$0xff]
    %v91 = vld [vmem:[#allocation5 + $0x38] sm:$0xff]
    %v92 = vld [vmem:[#allocation5 + $0x40] sm:$0xff]
    %v93 = vld [vmem:[#allocation5 + $0x48] sm:$0xff]
    %v94 = vld [vmem:[#allocation5 + $0x50] sm:$0xff]
    %v95 = vld [vmem:[#allocation5 + $0x58] sm:$0xff]
    %v96 = vld [vmem:[#allocation5 + $0x60] sm:$0xff]
    %v97 = vld [vmem:[#allocation5 + $0x68] sm:$0xff]
    %v98 = vld [vmem:[#allocation5 + $0x70] sm:$0xff]
    %v99 = vld [vmem:[#allocation5 + $0x78] sm:$0xff]
    %v100 = vld [vmem:[%s2] sm:$0x1]
    %v102 = vlaneseq
    %v103 = vshrl.u32 %v102, 7
    %v104 = vsub.s32 0, %v103
    %v105 = vrot.slane %v100, %v104
    %107 = vmatprep.subr.mxu0 0.0
    %108 = vmatpush1.msra.mxu0 %v99
    %109 = vmatprep.subr.mxu0 0.0
    %110 = vmatpush1.msra.mxu0 %v98
    %111 = vmatprep.subr.mxu0 0.0
    %112 = vmatpush1.msra.mxu0 %v97
    %113 = vmatprep.subr.mxu0 0.0
    %114 = vmatpush1.msra.mxu0 %v96
    %115 = vmatprep.subr.mxu0 0.0
    %116 = vmatpush1.msra.mxu0 %v95
    %117 = vmatprep.subr.mxu0 0.0
    %118 = vmatpush1.msra.mxu0 %v94
    %119 = vmatprep.subr.mxu0 0.0
    %120 = vmatpush1.msra.mxu0 %v93
    %121 = vmatprep.subr.mxu0 0.0
    %122 = vmatpush1.msra.mxu0 %v92
    %123 = vmatprep.subr.mxu0 0.0
    %124 = vmatpush1.msra.mxu0 %v91
    %125 = vmatprep.subr.mxu0 0.0
    %126 = vmatpush1.msra.mxu0 %v90
    %127 = vmatprep.subr.mxu0 0.0
    %128 = vmatpush1.msra.mxu0 %v89
    %129 = vmatprep.subr.mxu0 0.0
    %130 = vmatpush1.msra.mxu0 %v88
    %131 = vmatprep.subr.mxu0 0.0
    %132 = vmatpush1.msra.mxu0 %v87
    %133 = vmatprep.subr.mxu0 0.0
    %134 = vmatpush1.msra.mxu0 %v86
    %135 = vmatprep.subr.mxu0 0.0
    %136 = vmatpush1.msra.mxu0 %v85
    %137 = vmatprep.subr.mxu0 0.0
    %138 = vmatpush1.msra.mxu0 %v84
    %139 = vmatprep.subr.mxu0 0.0
    %140 = vmatpush2.msra.mxu0 0.0
    %141 = vmatprep.subr.mxu0 0.0
    %142 = vmatpush2.msra.mxu0 0.0
    %143 = vmatprep.subr.mxu0 0.0
    %144 = vmatpush2.msra.mxu0 0.0
    %145 = vmatprep.subr.mxu0 0.0
    %146 = vmatpush2.msra.mxu0 0.0
    %147 = vmatprep.subr.mxu0 0.0
    %148 = vmatpush2.msra.mxu0 0.0
    %149 = vmatprep.subr.mxu0 0.0
    %150 = vmatpush2.msra.mxu0 0.0
    %151 = vmatprep.subr.mxu0 0.0
    %152 = vmatpush2.msra.mxu0 0.0
    %153 = vmatprep.subr.mxu0 0.0
    %154 = vmatpush2.msra.mxu0 0.0
    %155 = vmatprep.subr.mxu0 0.0
    %156 = vmatpush2.msra.mxu0 0.0
    %157 = vmatprep.subr.mxu0 0.0
    %158 = vmatpush2.msra.mxu0 0.0
    %159 = vmatprep.subr.mxu0 0.0
    %160 = vmatpush2.msra.mxu0 0.0
    %161 = vmatprep.subr.mxu0 0.0
    %162 = vmatpush2.msra.mxu0 0.0
    %163 = vmatprep.subr.mxu0 0.0
    %164 = vmatpush2.msra.mxu0 0.0
    %165 = vmatprep.subr.mxu0 0.0
    %166 = vmatpush2.msra.mxu0 0.0
    %167 = vmatprep.subr.mxu0 0.0
    %168 = vmatpush2.msra.mxu0 0.0
    %169 = vmatprep.subr.mxu0 0.0
    %170 = vmatpush2.msra.mxu0 0.0
    %171 = vmatprep.mubr.f32.mxu0 0.0
    %172 = vmatmul.mubr.f32.gmra.mxu0 %v82
    %v173 = vpop.f32.mrf.mxu0
    %v174 = vadd.f32 %v105, %v173
    %v175 = vpop.f32.mrf.mxu0
    %176 = vmatprep.mubr.f32.mxu0 0.0
    %177 = vmatmul.mubr.f32.gmra.mxu0 %v83
    %v178 = vpop.f32.mrf.mxu0
    %v179 = vadd.f32 %v105, %v178
    %v180 = vpop.f32.mrf.mxu0
    %181 = vdwg.mxu0
    %vm182 = vcmp.gt.f32.partialorder %v174, 0.0
    %vm183 = vcmp.gt.f32.partialorder %v179, 0.0
    %v184 = vmul.f32 %v174, 0.2
    %v185 = vmul.f32 %v179, 0.2
    %v186 = vsel %vm182, %v174, %v184
    %v187 = vsel %vm183, %v179, %v185
    %v188 = vld [vmem:[#allocation7] sm:$0xff]
    %v189 = vld [vmem:[#allocation7 + $0x8] sm:$0xff]
    %v190 = vld [vmem:[#allocation7 + $0x10] sm:$0xff]
    %v191 = vld [vmem:[#allocation7 + $0x18] sm:$0xff]
    %v192 = vld [vmem:[#allocation7 + $0x20] sm:$0xff]
    %v193 = vld [vmem:[#allocation7 + $0x28] sm:$0xff]
    %v194 = vld [vmem:[#allocation7 + $0x30] sm:$0xff]
    %v195 = vld [vmem:[#allocation7 + $0x38] sm:$0xff]
    %v196 = vld [vmem:[#allocation7 + $0x40] sm:$0xff]
    %v197 = vld [vmem:[#allocation7 + $0x48] sm:$0xff]
    %v198 = vld [vmem:[#allocation7 + $0x50] sm:$0xff]
    %v199 = vld [vmem:[#allocation7 + $0x58] sm:$0xff]
    %v200 = vld [vmem:[#allocation7 + $0x60] sm:$0xff]
    %v201 = vld [vmem:[#allocation7 + $0x68] sm:$0xff]
    %v202 = vld [vmem:[#allocation7 + $0x70] sm:$0xff]
    %v203 = vld [vmem:[#allocation7 + $0x78] sm:$0xff]
    %v204 = vld [vmem:[%s4] sm:$0x1]
    %v206 = vlaneseq
    %v207 = vshrl.u32 %v206, 7
    %v208 = vsub.s32 0, %v207
    %v209 = vrot.slane %v204, %v208
    %211 = vmatprep.subr.mxu0 0.0
    %212 = vmatpush1.msra.mxu0 %v203
    %213 = vmatprep.subr.mxu0 0.0
    %214 = vmatpush1.msra.mxu0 %v202
    %215 = vmatprep.subr.mxu0 0.0
    %216 = vmatpush1.msra.mxu0 %v201
    %217 = vmatprep.subr.mxu0 0.0
    %218 = vmatpush1.msra.mxu0 %v200
    %219 = vmatprep.subr.mxu0 0.0
    %220 = vmatpush1.msra.mxu0 %v199
    %221 = vmatprep.subr.mxu0 0.0
    %222 = vmatpush1.msra.mxu0 %v198
    %223 = vmatprep.subr.mxu0 0.0
    %224 = vmatpush1.msra.mxu0 %v197
    %225 = vmatprep.subr.mxu0 0.0
    %226 = vmatpush1.msra.mxu0 %v196
    %227 = vmatprep.subr.mxu0 0.0
    %228 = vmatpush1.msra.mxu0 %v195
    %229 = vmatprep.subr.mxu0 0.0
    %230 = vmatpush1.msra.mxu0 %v194
    %231 = vmatprep.subr.mxu0 0.0
    %232 = vmatpush1.msra.mxu0 %v193
    %233 = vmatprep.subr.mxu0 0.0
    %234 = vmatpush1.msra.mxu0 %v192
    %235 = vmatprep.subr.mxu0 0.0
    %236 = vmatpush1.msra.mxu0 %v191
    %237 = vmatprep.subr.mxu0 0.0
    %238 = vmatpush1.msra.mxu0 %v190
    %239 = vmatprep.subr.mxu0 0.0
    %240 = vmatpush1.msra.mxu0 %v189
    %241 = vmatprep.subr.mxu0 0.0
    %242 = vmatpush1.msra.mxu0 %v188
    %243 = vmatprep.subr.mxu0 0.0
    %244 = vmatpush2.msra.mxu0 0.0
    %245 = vmatprep.subr.mxu0 0.0
    %246 = vmatpush2.msra.mxu0 0.0
    %247 = vmatprep.subr.mxu0 0.0
    %248 = vmatpush2.msra.mxu0 0.0
    %249 = vmatprep.subr.mxu0 0.0
    %250 = vmatpush2.msra.mxu0 0.0
    %251 = vmatprep.subr.mxu0 0.0
    %252 = vmatpush2.msra.mxu0 0.0
    %253 = vmatprep.subr.mxu0 0.0
    %254 = vmatpush2.msra.mxu0 0.0
    %255 = vmatprep.subr.mxu0 0.0
    %256 = vmatpush2.msra.mxu0 0.0
    %257 = vmatprep.subr.mxu0 0.0
    %258 = vmatpush2.msra.mxu0 0.0
    %259 = vmatprep.subr.mxu0 0.0
    %260 = vmatpush2.msra.mxu0 0.0
    %261 = vmatprep.subr.mxu0 0.0
    %262 = vmatpush2.msra.mxu0 0.0
    %263 = vmatprep.subr.mxu0 0.0
    %264 = vmatpush2.msra.mxu0 0.0
    %265 = vmatprep.subr.mxu0 0.0
    %266 = vmatpush2.msra.mxu0 0.0
    %267 = vmatprep.subr.mxu0 0.0
    %268 = vmatpush2.msra.mxu0 0.0
    %269 = vmatprep.subr.mxu0 0.0
    %270 = vmatpush2.msra.mxu0 0.0
    %271 = vmatprep.subr.mxu0 0.0
    %272 = vmatpush2.msra.mxu0 0.0
    %273 = vmatprep.subr.mxu0 0.0
    %274 = vmatpush2.msra.mxu0 0.0
    %275 = vmatprep.mubr.f32.mxu0 0.0
    %276 = vmatmul.mubr.f32.gmra.mxu0 %v186
    %v277 = vpop.f32.mrf.mxu0
    %v278 = vadd.f32 %v209, %v277
    %v279 = vpop.f32.mrf.mxu0
    %280 = vmatprep.mubr.f32.mxu0 0.0
    %281 = vmatmul.mubr.f32.gmra.mxu0 %v187
    %v282 = vpop.f32.mrf.mxu0
    %v283 = vadd.f32 %v209, %v282
    %v284 = vpop.f32.mrf.mxu0
    %285 = vdwg.mxu0
    %vm286 = vcmp.gt.f32.partialorder %v278, 0.0
    %vm287 = vcmp.gt.f32.partialorder %v283, 0.0
    %v288 = vmul.f32 %v278, 0.2
    %v289 = vmul.f32 %v283, 0.2
    %v290 = vsel %vm286, %v278, %v288
    %v291 = vsel %vm287, %v283, %v289
    %v292 = vld [vmem:[#allocation8] sm:$0xff]
    %v293 = vld [vmem:[#allocation8 + $0x8] sm:$0xff]
    %v294 = vld [vmem:[#allocation8 + $0x10] sm:$0xff]
    %v295 = vld [vmem:[#allocation8 + $0x18] sm:$0xff]
    %v296 = vld [vmem:[#allocation8 + $0x20] sm:$0xff]
    %v297 = vld [vmem:[#allocation8 + $0x28] sm:$0xff]
    %v298 = vld [vmem:[#allocation8 + $0x30] sm:$0xff]
    %v299 = vld [vmem:[#allocation8 + $0x38] sm:$0xff]
    %v300 = vld [vmem:[#allocation8 + $0x40] sm:$0xff]
    %v301 = vld [vmem:[#allocation8 + $0x48] sm:$0xff]
    %v302 = vld [vmem:[#allocation8 + $0x50] sm:$0xff]
    %v303 = vld [vmem:[#allocation8 + $0x58] sm:$0xff]
    %v304 = vld [vmem:[#allocation8 + $0x60] sm:$0xff]
    %v305 = vld [vmem:[#allocation8 + $0x68] sm:$0xff]
    %v306 = vld [vmem:[#allocation8 + $0x70] sm:$0xff]
    %v307 = vld [vmem:[#allocation8 + $0x78] sm:$0xff]
    %v308 = vld [vmem:[%s6] sm:$0x1]
    %v310 = vlaneseq
    %v311 = vshrl.u32 %v310, 7
    %v312 = vsub.s32 0, %v311
    %v313 = vrot.slane %v308, %v312
    %315 = vmatprep.subr.mxu0 0.0
    %316 = vmatpush1.msra.mxu0 %v307
    %317 = vmatprep.subr.mxu0 0.0
    %318 = vmatpush1.msra.mxu0 %v306
    %319 = vmatprep.subr.mxu0 0.0
    %320 = vmatpush1.msra.mxu0 %v305
    %321 = vmatprep.subr.mxu0 0.0
    %322 = vmatpush1.msra.mxu0 %v304
    %323 = vmatprep.subr.mxu0 0.0
    %324 = vmatpush1.msra.mxu0 %v303
    %325 = vmatprep.subr.mxu0 0.0
    %326 = vmatpush1.msra.mxu0 %v302
    %327 = vmatprep.subr.mxu0 0.0
    %328 = vmatpush1.msra.mxu0 %v301
    %329 = vmatprep.subr.mxu0 0.0
    %330 = vmatpush1.msra.mxu0 %v300
    %331 = vmatprep.subr.mxu0 0.0
    %332 = vmatpush1.msra.mxu0 %v299
    %333 = vmatprep.subr.mxu0 0.0
    %334 = vmatpush1.msra.mxu0 %v298
    %335 = vmatprep.subr.mxu0 0.0
    %336 = vmatpush1.msra.mxu0 %v297
    %337 = vmatprep.subr.mxu0 0.0
    %338 = vmatpush1.msra.mxu0 %v296
    %339 = vmatprep.subr.mxu0 0.0
    %340 = vmatpush1.msra.mxu0 %v295
    %341 = vmatprep.subr.mxu0 0.0
    %342 = vmatpush1.msra.mxu0 %v294
    %343 = vmatprep.subr.mxu0 0.0
    %344 = vmatpush1.msra.mxu0 %v293
    %345 = vmatprep.subr.mxu0 0.0
    %346 = vmatpush1.msra.mxu0 %v292
    %347 = vmatprep.subr.mxu0 0.0
    %348 = vmatpush2.msra.mxu0 0.0
    %349 = vmatprep.subr.mxu0 0.0
    %350 = vmatpush2.msra.mxu0 0.0
    %351 = vmatprep.subr.mxu0 0.0
    %352 = vmatpush2.msra.mxu0 0.0
    %353 = vmatprep.subr.mxu0 0.0
    %354 = vmatpush2.msra.mxu0 0.0
    %355 = vmatprep.subr.mxu0 0.0
    %356 = vmatpush2.msra.mxu0 0.0
    %357 = vmatprep.subr.mxu0 0.0
    %358 = vmatpush2.msra.mxu0 0.0
    %359 = vmatprep.subr.mxu0 0.0
    %360 = vmatpush2.msra.mxu0 0.0
    %361 = vmatprep.subr.mxu0 0.0
    %362 = vmatpush2.msra.mxu0 0.0
    %363 = vmatprep.subr.mxu0 0.0
    %364 = vmatpush2.msra.mxu0 0.0
    %365 = vmatprep.subr.mxu0 0.0
    %366 = vmatpush2.msra.mxu0 0.0
    %367 = vmatprep.subr.mxu0 0.0
    %368 = vmatpush2.msra.mxu0 0.0
    %369 = vmatprep.subr.mxu0 0.0
    %370 = vmatpush2.msra.mxu0 0.0
    %371 = vmatprep.subr.mxu0 0.0
    %372 = vmatpush2.msra.mxu0 0.0
    %373 = vmatprep.subr.mxu0 0.0
    %374 = vmatpush2.msra.mxu0 0.0
    %375 = vmatprep.subr.mxu0 0.0
    %376 = vmatpush2.msra.mxu0 0.0
    %377 = vmatprep.subr.mxu0 0.0
    %378 = vmatpush2.msra.mxu0 0.0
    %379 = vmatprep.mubr.f32.mxu0 0.0
    %380 = vmatmul.mubr.f32.gmra.mxu0 %v290
    %v381 = vpop.f32.mrf.mxu0
    %v382 = vadd.f32 %v313, %v381
    %v383 = vpop.f32.mrf.mxu0
    %384 = vmatprep.mubr.f32.mxu0 0.0
    %385 = vmatmul.mubr.f32.gmra.mxu0 %v291
    %v386 = vpop.f32.mrf.mxu0
    %v387 = vadd.f32 %v313, %v386
    %v388 = vpop.f32.mrf.mxu0
    %389 = vdwg.mxu0
    %v390 = vsub.f32 0.0, %v382
    %v391 = vsub.f32 0.0, %v387
    %v392 = vmul.f32 %v390, 1.442695
    %v393 = vpow.pop %v392
    %v394 = vmul.f32 %v391, 1.442695
    %v395 = vpow.pop %v394
    %v396 = vadd.f32 %v393, 1.0
    %v397 = vadd.f32 %v395, 1.0
    %v398 = vrcp.pop %v396
    %v399 = vrcp.pop %v397
    %400 = vst [vmem:[#allocation10] sm:$0xff] %v398
    %401 = vst [vmem:[#allocation10 + $0x8] sm:$0xff] %v399
    // Predicated region
    $region46: #{tpu_custom_call.1} parent=1 // pred_check
      _
    $region47: #{tpu_custom_call.1} parent=1 // pred_check_branch
      %403 = sbr.rel (0) target = $region49
    $region48: #{tpu_custom_call.1} parent=1 // pred_region
      %s405 = ssub.s32 256, 256
      %406 = vsyncadd [#allocation4], %s405
      %s407 = sshll.u32 [#allocation10], 4
      %s408 = int_to_ptr.vmem [resolvable:$true] %s407
      %413 = dma.vmem_to_hbm [thread:$0]  %s408, 256, %s7, [#allocation4], 128, 128, 8
    $region49: #{tpu_custom_call.1} parent=1 // pred_fallthru
      _
    // Predicated region
    $region50: #{tpu_custom_call.1} parent=1 // pred_check
      _
    $region51: #{tpu_custom_call.1} parent=1 // pred_check_branch
      %415 = sbr.rel (0) target = $region53
    $region52: #{tpu_custom_call.1} parent=1 // pred_region
      %416 = dma.done [#allocation4], 256
    $region53: #{tpu_custom_call.1} parent=1 // pred_fallthru
      _
    %417 = vsyncpa [#allocation3], 1
    %418 = vsyncpa [#allocation6], 1
    %419 = vsyncpa [#allocation9], 1
    %420 = vsyncpa [#allocation4], 1

</llo_original>
